<compile_context>
chip_gen: v7x
topology: tpu7x:2x2x1
jax: 0.10.0
libtpu: 0.0.40
codegen_flags: <defaults>
</compile_context>

<pallas_src>
import jax
import jax.numpy as jnp
from jax import lax
from jax.experimental import pallas as pl
from jax.experimental.pallas import tpu as pltpu

# Module constants (from CartpoleDx.__init__)
DT = 0.05
FORCE_MAG = 100.0
DEFAULT_PARAMS = (9.81, 1.0, 0.1, 0.5)  # gravity, masscart, masspole, length

LANE = 128            # vreg lane width
SUBLANE = 8           # f32 vreg sublane depth
MAX_TILE_SUB = 1024   # sublane rows per grid step.  (5 in + 1 u + 5 out)
                      # component blocks x 2 buffers x 512 KiB ~= 11 MiB:
                      # inside v5e's 16 MiB scoped-VMEM default, and well
                      # inside v6e/v7x's 32 MiB, so no vmem_limit_bytes needed.
ROLLOUT_VMEM_BUDGET = 12 * 1024 * 1024  # double-buffered block budget (all gens)


def _step(g, pml, itm, c1, c2, u, x, dx, cos_th, sin_th, dth):
    """One CartpoleDx dynamics step on full (tile_sub, 128) slabs.

    Scalar params (precomputed in the wrapper, read from SMEM):
      g   = gravity
      pml = masspole * length              (polemass_length)
      itm = 1 / total_mass
      c1  = (4/3) * length
      c2  = polemass_length / total_mass
    """
    u = jnp.clip(u, -FORCE_MAG, FORCE_MAG)
    cos2 = cos_th * cos_th                      # shared by denom and nrm

    cart_in = (u + pml * dth * dth * sin_th) * itm
    denom = c1 - c2 * cos2
    # approx vrcp (EUP, near-free) + one Newton-Raphson step on the VPU
    # restores ~f32 precision (err ~ approx_err^2 ~ 1e-8).
    r = pl.reciprocal(denom, approx=True)
    r = r * (2.0 - denom * r)
    th_acc = (g * sin_th - cos_th * cart_in) * r
    xacc = cart_in - c2 * th_acc * cos_th

    # Angle addition instead of atan2 + cos + sin of the full angle:
    #   th_new = atan2(sin, cos) + d
    #   cos(th_new) = (cos*cos(d) - sin*sin(d)) * rsqrt(cos^2 + sin^2)
    d = DT * dth
    cd = jnp.cos(d)
    sd = jnp.sin(d)
    # Keep the 1e-30 guard: padded lanes carry (cos, sin) = (0, 0) and would
    # otherwise produce inf * 0 = NaN through rsqrt.
    nrm = jnp.maximum(cos2 + sin_th * sin_th, 1e-30)
    inv_r = lax.rsqrt(nrm)                      # fused sqrt+recip: one EUP op
    cos_new = (cos_th * cd - sin_th * sd) * inv_r
    sin_new = (sin_th * cd + cos_th * sd) * inv_r

    return (x + DT * dx,
            dx + DT * xacc,
            cos_new,
            sin_new,
            dth + DT * th_acc)


def _cartpole_kernel(params_ref, state_ref, u_ref, out_ref):
    g = params_ref[0]
    pml = params_ref[1]
    itm = params_ref[2]
    c1 = params_ref[3]
    c2 = params_ref[4]

    x, dx, cos_new, sin_new, dth = _step(
        g, pml, itm, c1, c2,
        u_ref[0],
        state_ref[0], state_ref[1], state_ref[2], state_ref[3], state_ref[4])

    # Full-tile stores per component (dense across sublanes and lanes).
    out_ref[0] = x
    out_ref[1] = dx
    out_ref[2] = cos_new
    out_ref[3] = sin_new
    out_ref[4] = dth


def _cartpole_rollout_kernel(params_ref, state_ref, u_ref, out_ref):
    """Fused T-step rollout: state lives in vregs/VMEM for the whole tile;
    only u[t] is read per step.  Writes the final state."""
    g = params_ref[0]
    pml = params_ref[1]
    itm = params_ref[2]
    c1 = params_ref[3]
    c2 = params_ref[4]
    n_steps = u_ref.shape[0]

    def body(t, carry):
        x, dx, cos_th, sin_th, dth = carry
        return _step(g, pml, itm, c1, c2, u_ref[t], x, dx, cos_th, sin_th, dth)

    init = (state_ref[0], state_ref[1], state_ref[2], state_ref[3], state_ref[4])
    x, dx, cos_new, sin_new, dth = lax.fori_loop(0, n_steps, body, init)

    out_ref[0] = x
    out_ref[1] = dx
    out_ref[2] = cos_new
    out_ref[3] = sin_new
    out_ref[4] = dth


def _round_up(n, m):
    return ((n + m - 1) // m) * m


def _derived_params(params):
    """Hoist all scalar divides off the vector units (SMEM scalars)."""
    gravity, masscart, masspole, length = (params[0], params[1],
                                           params[2], params[3])
    total_mass = masspole + masscart
    pml = masspole * length
    itm = 1.0 / total_mass
    return jnp.stack(
        [gravity, pml, itm, (4.0 / 3.0) * length, pml * itm]
    ).astype(jnp.float32)


def _cartpole_pallas_cm(derived_params, state_cm, u_cm, *, tile_sub):
    """Component-major entry: state_cm (5, Bs, 128), u_cm (1, Bs, 128)."""
    n_comp, bs, lane = state_cm.shape
    assert n_comp == 5 and lane == LANE and bs % tile_sub == 0
    n_tiles = bs // tile_sub
    return pl.pallas_call(
        _cartpole_kernel,
        out_shape=jax.ShapeDtypeStruct((5, bs, LANE), jnp.float32),
        grid=(n_tiles,),
        in_specs=[
            pl.BlockSpec(memory_space=pltpu.MemorySpace.SMEM),       # scalars
            pl.BlockSpec((5, tile_sub, LANE), lambda i: (0, i, 0)),  # state
            pl.BlockSpec((1, tile_sub, LANE), lambda i: (0, i, 0)),  # u
        ],
        out_specs=pl.BlockSpec((5, tile_sub, LANE), lambda i: (0, i, 0)),
        # TODO(synk): on v7x verify via xprof that "parallel" actually shards
        # batch tiles across both TensorCores; if not, switch to CORE_PARALLEL.
        compiler_params=pltpu.CompilerParams(
            dimension_semantics=("parallel",)),
    )(derived_params, state_cm, u_cm)


def _single_step_tiling(B):
    bs_needed = pl.cdiv(B, LANE)
    if bs_needed <= MAX_TILE_SUB:
        tile_sub = _round_up(max(bs_needed, 1), SUBLANE)
        bs = tile_sub
    else:
        tile_sub = MAX_TILE_SUB
        bs = _round_up(bs_needed, MAX_TILE_SUB)
    return tile_sub, bs


def cartpole_dx_forward(state, u, params=None):
    """Pallas implementation of CartpoleDx.forward.

    state: (B, 5) or (5,) float32   [x, dx, cos_th, sin_th, dth]
    u:     (B, 1) or (1,) float32
    returns next state with the same batch convention as the input.

    NOTE: for real callers the component-major entry (_cartpole_pallas_cm) or
    the fused rollout (cartpole_dx_rollout) avoids the (B,5)<->(5,B) HBM
    transposes done here purely to preserve the PyTorch interface.
    """
    if params is None:
        params = jnp.asarray(DEFAULT_PARAMS, dtype=jnp.float32)
    else:
        params = jnp.asarray(params, dtype=jnp.float32)
    assert params.shape == (4,)

    squeeze = state.ndim == 1
    if squeeze:
        state = state[None, :]
        u = u[None, :]
    state = jnp.asarray(state, jnp.float32)
    u = jnp.asarray(u, jnp.float32)
    B = state.shape[0]

    derived = _derived_params(params)

    tile_sub, bs = _single_step_tiling(B)
    bp = bs * LANE

    # Component-major layout (transposes are interface plumbing; see NOTE).
    state_cm = jnp.pad(state, ((0, bp - B), (0, 0))).T.reshape(5, bs, LANE)
    u_cm = jnp.pad(u, ((0, bp - B), (0, 0))).T.reshape(1, bs, LANE)

    out_cm = _cartpole_pallas_cm(derived, state_cm, u_cm, tile_sub=tile_sub)
    out = out_cm.reshape(5, bp).T[:B]
    if squeeze:
        out = out[0]
    return out


def cartpole_dx_rollout(state, u_seq, params=None):
    """Fused T-step rollout: applies CartpoleDx.forward T times with the state
    kept resident on-chip; HBM traffic is ~(40 + 4*T) B/lane instead of
    44*T B/lane for T separate single-step calls.

    state: (B, 5) float32, u_seq: (T, B, 1) float32.  Returns final (B, 5).
    """
    if params is None:
        params = jnp.asarray(DEFAULT_PARAMS, dtype=jnp.float32)
    else:
        params = jnp.asarray(params, dtype=jnp.float32)
    state = jnp.asarray(state, jnp.float32)
    u_seq = jnp.asarray(u_seq, jnp.float32)
    T = u_seq.shape[0]
    B = state.shape[0]
    assert u_seq.shape == (T, B, 1)

    derived = _derived_params(params)

    # Tile size bounded by a double-buffered VMEM budget that fits all of
    # v5e (16 MiB scoped default) / v6e / v7x (32 MiB): 5 in + 5 out + T u
    # rows of (LANE * 4 B) per sublane row, x2 buffers.
    bs_needed = pl.cdiv(B, LANE)
    per_row_bytes = (10 + T) * LANE * 4 * 2
    cap = max(SUBLANE, (ROLLOUT_VMEM_BUDGET // per_row_bytes)
              // SUBLANE * SUBLANE)
    cap = min(cap, MAX_TILE_SUB)
    if bs_needed <= cap:
        tile_sub = _round_up(max(bs_needed, 1), SUBLANE)
        bs = tile_sub
    else:
        tile_sub = cap
        bs = _round_up(bs_needed, tile_sub)
    bp = bs * LANE
    n_tiles = bs // tile_sub

    state_cm = jnp.pad(state, ((0, bp - B), (0, 0))).T.reshape(5, bs, LANE)
    u_cm = jnp.pad(u_seq[:, :, 0], ((0, 0), (0, bp - B))).reshape(T, bs, LANE)

    out_cm = pl.pallas_call(
        _cartpole_rollout_kernel,
        out_shape=jax.ShapeDtypeStruct((5, bs, LANE), jnp.float32),
        grid=(n_tiles,),
        in_specs=[
            pl.BlockSpec(memory_space=pltpu.MemorySpace.SMEM),         # scalars
            pl.BlockSpec((5, tile_sub, LANE), lambda i: (0, i, 0)),    # state0
            pl.BlockSpec((T, tile_sub, LANE), lambda i: (0, i, 0)),    # u[t]
        ],
        out_specs=pl.BlockSpec((5, tile_sub, LANE), lambda i: (0, i, 0)),
        compiler_params=pltpu.CompilerParams(
            dimension_semantics=("parallel",)),
    )(derived, state_cm, u_cm)
    return out_cm.reshape(5, bp).T[:B]


def _reference_forward(state, u, params):
    """Pure-JAX reference matching the PyTorch forward, for verification."""
    gravity, masscart, masspole, length = params
    total_mass = masspole + masscart
    polemass_length = masspole * length
    uu = jnp.clip(u[:, 0], -FORCE_MAG, FORCE_MAG)
    x, dx, cos_th, sin_th, dth = [state[:, i] for i in range(5)]
    th = jnp.arctan2(sin_th, cos_th)
    cart_in = (uu + polemass_length * dth ** 2 * sin_th) / total_mass
    th_acc = (gravity * sin_th - cos_th * cart_in) / (
        length * (4.0 / 3.0 - masspole * cos_th ** 2 / total_mass)
    )
    xacc = cart_in - polemass_length * th_acc * cos_th / total_mass
    x = x + DT * dx
    dx = dx + DT * xacc
    th = th + DT * dth
    dth = dth + DT * th_acc
    return jnp.stack((x, dx, jnp.cos(th), jnp.sin(th), dth), axis=1)


def _reference_rollout(state, u_seq, params):
    for t in range(u_seq.shape[0]):
        state = _reference_forward(state, u_seq[t], params)
    return state


if __name__ == "__main__":
    params = jnp.asarray(DEFAULT_PARAMS, dtype=jnp.float32)

    last_ref = None
    last_state = None
    last_u = None
    for B in (8, 300):
        key = jax.random.PRNGKey(0)
        k1, k2, k3 = jax.random.split(key, 3)
        theta = jax.random.uniform(k1, (B,), minval=-jnp.pi, maxval=jnp.pi)
        rest = jax.random.normal(k2, (B, 3))
        state = jnp.stack(
            [rest[:, 0], rest[:, 1], jnp.cos(theta), jnp.sin(theta), rest[:, 2]],
            axis=1,
        ).astype(jnp.float32)
        u = (jax.random.normal(k3, (B, 1)) * 50.0).astype(jnp.float32)

        out = jax.block_until_ready(cartpole_dx_forward(state, u))
        ref = _reference_forward(state, u, params)
        assert out.shape == (B, 5)
        assert jnp.allclose(out, ref, atol=1e-4, rtol=1e-5), float(
            jnp.max(jnp.abs(out - ref))
        )
        last_ref, last_state, last_u = ref, state, u

    # 1-D (squeeze) path, matching the nn.Module convention.
    out1 = jax.block_until_ready(cartpole_dx_forward(last_state[0], last_u[0]))
    assert out1.shape == (5,)
    assert jnp.allclose(out1, last_ref[0], atol=1e-4, rtol=1e-5)

    # Fused rollout (state resident on-chip across T steps).
    B, T = 8, 6
    key = jax.random.PRNGKey(0)
    k1, k2, k3 = jax.random.split(key, 3)
    theta = jax.random.uniform(k1, (B,), minval=-jnp.pi, maxval=jnp.pi)
    rest = jax.random.normal(k2, (B, 3))
    state0 = jnp.stack(
        [rest[:, 0], rest[:, 1], jnp.cos(theta), jnp.sin(theta), rest[:, 2]],
        axis=1,
    ).astype(jnp.float32)
    u_seq = (jax.random.normal(k3, (T, B, 1)) * 20.0).astype(jnp.float32)

    out_roll = jax.block_until_ready(cartpole_dx_rollout(state0, u_seq))
    ref_roll = _reference_rollout(state0, u_seq, params)
    assert out_roll.shape == (B, 5)
    assert jnp.allclose(out_roll, ref_roll, atol=1e-3, rtol=1e-3), float(
        jnp.max(jnp.abs(out_roll - ref_roll))
    )

    print("KERNEL_OK")
</pallas_src>

<mosaic_0001>
module attributes {stable_mosaic.version = 11 : i64} {
  func.func @_cartpole_kernel(%arg0: i32, %arg1: memref<5xf32, #tpu.memory_space<smem>>, %arg2: memref<5x8x128xf32, #tpu.memory_space<vmem>>, %arg3: memref<1x8x128xf32, #tpu.memory_space<vmem>>, %arg4: memref<5x8x128xf32, #tpu.memory_space<vmem>>) attributes {dimension_semantics = [#tpu.dimension_semantics<parallel>], iteration_bounds = array<i64: 1>, scalar_prefetch = 0 : i64, scratch_operands = 0 : i64, tpu.core_type = #tpu.core_type<tc>, window_params = [{transform_indices = @transform_0, window_bounds = array<i64: 5>}, {transform_indices = @transform_1, window_bounds = array<i64: 5, 8, 128>}, {transform_indices = @transform_2, window_bounds = array<i64: 1, 8, 128>}, {transform_indices = @transform_3, window_bounds = array<i64: 5, 8, 128>}]} {
    %c0 = arith.constant 0 : index
    %0 = memref.load %arg1[%c0] : memref<5xf32, #tpu.memory_space<smem>>
    %c1 = arith.constant 1 : index
    %1 = memref.load %arg1[%c1] : memref<5xf32, #tpu.memory_space<smem>>
    %c2 = arith.constant 2 : index
    %2 = memref.load %arg1[%c2] : memref<5xf32, #tpu.memory_space<smem>>
    %c3 = arith.constant 3 : index
    %3 = memref.load %arg1[%c3] : memref<5xf32, #tpu.memory_space<smem>>
    %c4 = arith.constant 4 : index
    %4 = memref.load %arg1[%c4] : memref<5xf32, #tpu.memory_space<smem>>
    %c0_0 = arith.constant 0 : index
    %c0_1 = arith.constant 0 : index
    %c0_2 = arith.constant 0 : index
    %5 = vector.load %arg3[%c0_0, %c0_1, %c0_2] : memref<1x8x128xf32, #tpu.memory_space<vmem>>, vector<1x8x128xf32>
    %6 = vector.shape_cast %5 : vector<1x8x128xf32> to vector<8x128xf32>
    %c0_3 = arith.constant 0 : index
    %c0_4 = arith.constant 0 : index
    %c0_5 = arith.constant 0 : index
    %7 = vector.load %arg2[%c0_3, %c0_4, %c0_5] : memref<5x8x128xf32, #tpu.memory_space<vmem>>, vector<1x8x128xf32>
    %8 = vector.shape_cast %7 : vector<1x8x128xf32> to vector<8x128xf32>
    %c1_6 = arith.constant 1 : index
    %c0_7 = arith.constant 0 : index
    %c0_8 = arith.constant 0 : index
    %9 = vector.load %arg2[%c1_6, %c0_7, %c0_8] : memref<5x8x128xf32, #tpu.memory_space<vmem>>, vector<1x8x128xf32>
    %10 = vector.shape_cast %9 : vector<1x8x128xf32> to vector<8x128xf32>
    %c2_9 = arith.constant 2 : index
    %c0_10 = arith.constant 0 : index
    %c0_11 = arith.constant 0 : index
    %11 = vector.load %arg2[%c2_9, %c0_10, %c0_11] : memref<5x8x128xf32, #tpu.memory_space<vmem>>, vector<1x8x128xf32>
    %12 = vector.shape_cast %11 : vector<1x8x128xf32> to vector<8x128xf32>
    %c3_12 = arith.constant 3 : index
    %c0_13 = arith.constant 0 : index
    %c0_14 = arith.constant 0 : index
    %13 = vector.load %arg2[%c3_12, %c0_13, %c0_14] : memref<5x8x128xf32, #tpu.memory_space<vmem>>, vector<1x8x128xf32>
    %14 = vector.shape_cast %13 : vector<1x8x128xf32> to vector<8x128xf32>
    %c4_15 = arith.constant 4 : index
    %c0_16 = arith.constant 0 : index
    %c0_17 = arith.constant 0 : index
    %15 = vector.load %arg2[%c4_15, %c0_16, %c0_17] : memref<5x8x128xf32, #tpu.memory_space<vmem>>, vector<1x8x128xf32>
    %16 = vector.shape_cast %15 : vector<1x8x128xf32> to vector<8x128xf32>
    %cst = arith.constant -1.000000e+02 : f32
    %cst_18 = arith.constant 1.000000e+02 : f32
    %17 = vector.broadcast %cst : f32 to vector<8x128xf32>
    %18 = arith.maximumf %17, %6 : vector<8x128xf32>
    %19 = vector.broadcast %cst_18 : f32 to vector<8x128xf32>
    %20 = arith.minimumf %19, %18 : vector<8x128xf32>
    %21 = arith.mulf %12, %12 : vector<8x128xf32>
    %22 = vector.broadcast %1 : f32 to vector<8x128xf32>
    %23 = arith.mulf %22, %16 : vector<8x128xf32>
    %24 = arith.mulf %23, %16 : vector<8x128xf32>
    %25 = arith.mulf %24, %14 : vector<8x128xf32>
    %26 = arith.addf %20, %25 : vector<8x128xf32>
    %27 = vector.broadcast %2 : f32 to vector<8x128xf32>
    %28 = arith.mulf %26, %27 : vector<8x128xf32>
    %29 = vector.broadcast %4 : f32 to vector<8x128xf32>
    %30 = arith.mulf %29, %21 : vector<8x128xf32>
    %31 = vector.broadcast %3 : f32 to vector<8x128xf32>
    %32 = arith.subf %31, %30 : vector<8x128xf32>
    %33 = tpu.reciprocal %32 {approx = true} : vector<8x128xf32> -> vector<8x128xf32>
    %34 = arith.mulf %32, %33 : vector<8x128xf32>
    %cst_19 = arith.constant 2.000000e+00 : f32
    %35 = vector.broadcast %cst_19 : f32 to vector<8x128xf32>
    %36 = arith.subf %35, %34 : vector<8x128xf32>
    %37 = arith.mulf %33, %36 : vector<8x128xf32>
    %38 = vector.broadcast %0 : f32 to vector<8x128xf32>
    %39 = arith.mulf %38, %14 : vector<8x128xf32>
    %40 = arith.mulf %12, %28 : vector<8x128xf32>
    %41 = arith.subf %39, %40 : vector<8x128xf32>
    %42 = arith.mulf %41, %37 : vector<8x128xf32>
    %43 = vector.broadcast %4 : f32 to vector<8x128xf32>
    %44 = arith.mulf %43, %42 : vector<8x128xf32>
    %45 = arith.mulf %44, %12 : vector<8x128xf32>
    %46 = arith.subf %28, %45 : vector<8x128xf32>
    %cst_20 = arith.constant 5.000000e-02 : f32
    %47 = vector.broadcast %cst_20 : f32 to vector<8x128xf32>
    %48 = arith.mulf %47, %16 : vector<8x128xf32>
    %49 = math.cos %48 : vector<8x128xf32>
    %50 = math.sin %48 : vector<8x128xf32>
    %51 = arith.mulf %14, %14 : vector<8x128xf32>
    %52 = arith.addf %21, %51 : vector<8x128xf32>
    %cst_21 = arith.constant 1.000000e-30 : f32
    %53 = vector.broadcast %cst_21 : f32 to vector<8x128xf32>
    %54 = arith.maximumf %52, %53 : vector<8x128xf32>
    %55 = math.rsqrt %54 : vector<8x128xf32>
    %56 = arith.mulf %12, %49 : vector<8x128xf32>
    %57 = arith.mulf %14, %50 : vector<8x128xf32>
    %58 = arith.subf %56, %57 : vector<8x128xf32>
    %59 = arith.mulf %58, %55 : vector<8x128xf32>
    %60 = arith.mulf %14, %49 : vector<8x128xf32>
    %61 = arith.mulf %12, %50 : vector<8x128xf32>
    %62 = arith.addf %60, %61 : vector<8x128xf32>
    %63 = arith.mulf %62, %55 : vector<8x128xf32>
    %cst_22 = arith.constant 5.000000e-02 : f32
    %64 = vector.broadcast %cst_22 : f32 to vector<8x128xf32>
    %65 = arith.mulf %64, %10 : vector<8x128xf32>
    %66 = arith.addf %8, %65 : vector<8x128xf32>
    %cst_23 = arith.constant 5.000000e-02 : f32
    %67 = vector.broadcast %cst_23 : f32 to vector<8x128xf32>
    %68 = arith.mulf %67, %46 : vector<8x128xf32>
    %69 = arith.addf %10, %68 : vector<8x128xf32>
    %cst_24 = arith.constant 5.000000e-02 : f32
    %70 = vector.broadcast %cst_24 : f32 to vector<8x128xf32>
    %71 = arith.mulf %70, %42 : vector<8x128xf32>
    %72 = arith.addf %16, %71 : vector<8x128xf32>
    %c0_25 = arith.constant 0 : index
    %c0_26 = arith.constant 0 : index
    %c0_27 = arith.constant 0 : index
    %73 = vector.load %arg4[%c0_25, %c0_26, %c0_27] : memref<5x8x128xf32, #tpu.memory_space<vmem>>, vector<1x8x128xf32>
    %74 = vector.shape_cast %73 : vector<1x8x128xf32> to vector<8x128xf32>
    %75 = vector.shape_cast %66 : vector<8x128xf32> to vector<1x8x128xf32>
    tpu.vector_store %arg4[%c0_25, %c0_26, %c0_27], %75 {strides = array<i32>} : memref<5x8x128xf32, #tpu.memory_space<vmem>>, vector<1x8x128xf32>,
    %c1_28 = arith.constant 1 : index
    %c0_29 = arith.constant 0 : index
    %c0_30 = arith.constant 0 : index
    %76 = vector.load %arg4[%c1_28, %c0_29, %c0_30] : memref<5x8x128xf32, #tpu.memory_space<vmem>>, vector<1x8x128xf32>
    %77 = vector.shape_cast %76 : vector<1x8x128xf32> to vector<8x128xf32>
    %78 = vector.shape_cast %69 : vector<8x128xf32> to vector<1x8x128xf32>
    tpu.vector_store %arg4[%c1_28, %c0_29, %c0_30], %78 {strides = array<i32>} : memref<5x8x128xf32, #tpu.memory_space<vmem>>, vector<1x8x128xf32>,
    %c2_31 = arith.constant 2 : index
    %c0_32 = arith.constant 0 : index
    %c0_33 = arith.constant 0 : index
    %79 = vector.load %arg4[%c2_31, %c0_32, %c0_33] : memref<5x8x128xf32, #tpu.memory_space<vmem>>, vector<1x8x128xf32>
    %80 = vector.shape_cast %79 : vector<1x8x128xf32> to vector<8x128xf32>
    %81 = vector.shape_cast %59 : vector<8x128xf32> to vector<1x8x128xf32>
    tpu.vector_store %arg4[%c2_31, %c0_32, %c0_33], %81 {strides = array<i32>} : memref<5x8x128xf32, #tpu.memory_space<vmem>>, vector<1x8x128xf32>,
    %c3_34 = arith.constant 3 : index
    %c0_35 = arith.constant 0 : index
    %c0_36 = arith.constant 0 : index
    %82 = vector.load %arg4[%c3_34, %c0_35, %c0_36] : memref<5x8x128xf32, #tpu.memory_space<vmem>>, vector<1x8x128xf32>
    %83 = vector.shape_cast %82 : vector<1x8x128xf32> to vector<8x128xf32>
    %84 = vector.shape_cast %63 : vector<8x128xf32> to vector<1x8x128xf32>
    tpu.vector_store %arg4[%c3_34, %c0_35, %c0_36], %84 {strides = array<i32>} : memref<5x8x128xf32, #tpu.memory_space<vmem>>, vector<1x8x128xf32>,
    %c4_37 = arith.constant 4 : index
    %c0_38 = arith.constant 0 : index
    %c0_39 = arith.constant 0 : index
    %85 = vector.load %arg4[%c4_37, %c0_38, %c0_39] : memref<5x8x128xf32, #tpu.memory_space<vmem>>, vector<1x8x128xf32>
    %86 = vector.shape_cast %85 : vector<1x8x128xf32> to vector<8x128xf32>
    %87 = vector.shape_cast %72 : vector<8x128xf32> to vector<1x8x128xf32>
    tpu.vector_store %arg4[%c4_37, %c0_38, %c0_39], %87 {strides = array<i32>} : memref<5x8x128xf32, #tpu.memory_space<vmem>>, vector<1x8x128xf32>,
    return
  }
  func.func @transform_0(%arg0: i32) -> i32 {
    %c0_i32 = arith.constant 0 : i32
    %c0_i32_0 = arith.constant 0 : i32
    return %c0_i32 : i32
  }
  func.func @transform_1(%arg0: i32) -> (i32, i32, i32) {
    %c0_i32 = arith.constant 0 : i32
    %c0_i32_0 = arith.constant 0 : i32
    %c0_i32_1 = arith.constant 0 : i32
    return %c0_i32, %arg0, %c0_i32_0 : i32, i32, i32
  }
  func.func @transform_2(%arg0: i32) -> (i32, i32, i32) {
    %c0_i32 = arith.constant 0 : i32
    %c0_i32_0 = arith.constant 0 : i32
    %c0_i32_1 = arith.constant 0 : i32
    return %c0_i32, %arg0, %c0_i32_0 : i32, i32, i32
  }
  func.func @transform_3(%arg0: i32) -> (i32, i32, i32) {
    %c0_i32 = arith.constant 0 : i32
    %c0_i32_0 = arith.constant 0 : i32
    %c0_i32_1 = arith.constant 0 : i32
    return %c0_i32, %arg0, %c0_i32_0 : i32, i32, i32
  }
}

</mosaic_0001>

<llo_original>
// kernel: tpu_custom_call.1
$region0: #{tpu_custom_call.1}
  #allocation0 [shape = 'u32[]', space=smem, size = 0x4, offset = 0x4, fixed_abs, tag = 'smem constant byte address 0x4 - core index']
  #allocation1 [shape = 'u32[144,128]{1,0:T(1,128)}', space=vmem, size = 0x12000, scoped, tag = 'internal scratch']
  %s0 = inlined_call_operand.hbm [shape: f32[5], index: 0, kind: input, shape index: {}]
  %s1 = inlined_call_operand.hbm [shape: f32[5,8,128], index: 1, kind: input, shape index: {}]
  %s2 = inlined_call_operand.hbm [shape: f32[1,8,128], index: 2, kind: input, shape index: {}]
  %s3 = inlined_call_operand.hbm [shape: f32[5,8,128], index: 3, kind: output, shape index: {}]
  %s4 = sld [smem:[#allocation0]]
  $region34: #{tpu_custom_call.1} parent=0
    _
  %s6 = ssub.s32 1, %s4
  %s7 = scalar_select 0, %s6, %s4
  $region1: #{tpu_custom_call.1} parent=0
    #allocation2 [shape = 'u8[512]{0}', space=smem, size = 0x200, scoped, tag = 'input window, operand 0, single buffered']
    #allocation3 [shape = 's32[1]{0}', space=sflag, size = 0x4, scoped, tag = 'scoped memory for tpu_custom_call.1']
    #allocation4 [shape = 's32[1]{0}', space=sflag, size = 0x4, scoped, tag = 'scoped memory for tpu_custom_call.1']
    #allocation5 [shape = 's32[1]{0}', space=sflag, size = 0x4, scoped, tag = 'scoped memory for tpu_custom_call.1']
    #allocation6 [shape = 'u8[20480]{0}', space=vmem, size = 0x5000, scoped, tag = 'input window, operand 1, single buffered']
    #allocation7 [shape = 'u8[4096]{0}', space=vmem, size = 0x1000, scoped, tag = 'input window, operand 2, single buffered']
    #allocation8 [shape = 's32[1]{0}', space=sflag, size = 0x4, scoped, tag = 'scoped memory for tpu_custom_call.1']
    #allocation9 [shape = 'u8[20480]{0}', space=vmem, size = 0x5000, scoped, tag = 'output window, operand 0, single buffered']
    %8 = vsyncpa [#allocation5], 0
    %9 = vsyncpa [#allocation3], 0
    %10 = vsyncpa [#allocation8], 0
    %11 = vsyncpa [#allocation4], 0
    // Predicated region
    $region2: #{tpu_custom_call.1} parent=1 // pred_check
      _
    $region3: #{tpu_custom_call.1} parent=1 // pred_check_branch
      %13 = sbr.rel (0) target = $region5
    $region4: #{tpu_custom_call.1} parent=1 // pred_region
      %s15 = ssub.s32 16, 16
      %16 = vsyncadd [#allocation5], %s15
      %19 = dma.hbm_to_smem %s0, 16, [#allocation2], [#allocation5]
    $region5: #{tpu_custom_call.1} parent=1 // pred_fallthru
      _
    // Predicated region
    $region6: #{tpu_custom_call.1} parent=1 // pred_check
      _
    $region7: #{tpu_custom_call.1} parent=1 // pred_check_branch
      %21 = sbr.rel (0) target = $region9
    $region8: #{tpu_custom_call.1} parent=1 // pred_region
      %s23 = ssub.s32 640, 640
      %24 = vsyncadd [#allocation3], %s23
      %s25 = sshll.u32 [#allocation6], 4
      %s26 = int_to_ptr.vmem [resolvable:$true] %s25
      %31 = dma.hbm_to_vmem [thread:$0]  %s1, 640, %s26, [#allocation3], 128, 128, 8
    $region9: #{tpu_custom_call.1} parent=1 // pred_fallthru
      _
    // Predicated region
    $region10: #{tpu_custom_call.1} parent=1 // pred_check
      _
    $region11: #{tpu_custom_call.1} parent=1 // pred_check_branch
      %33 = sbr.rel (0) target = $region13
    $region12: #{tpu_custom_call.1} parent=1 // pred_region
      %s35 = ssub.s32 128, 128
      %36 = vsyncadd [#allocation8], %s35
      %s38 = sshll.u32 [#allocation7], 4
      %s39 = int_to_ptr.vmem [resolvable:$true] %s38
      %41 = dma.hbm_to_vmem [thread:$0]  %s2, 128, %s39, [#allocation8]
    $region13: #{tpu_custom_call.1} parent=1 // pred_fallthru
      _
    // Predicated region
    $region14: #{tpu_custom_call.1} parent=1 // pred_check
      _
    $region15: #{tpu_custom_call.1} parent=1 // pred_check_branch
      %43 = sbr.rel (0) target = $region17
    $region16: #{tpu_custom_call.1} parent=1 // pred_region
      %44 = dma.done [#allocation5], 16
    $region17: #{tpu_custom_call.1} parent=1 // pred_fallthru
      _
    // Predicated region
    $region18: #{tpu_custom_call.1} parent=1 // pred_check
      _
    $region19: #{tpu_custom_call.1} parent=1 // pred_check_branch
      %46 = sbr.rel (0) target = $region21
    $region20: #{tpu_custom_call.1} parent=1 // pred_region
      %47 = dma.done [#allocation3], 640
    $region21: #{tpu_custom_call.1} parent=1 // pred_fallthru
      _
    // Predicated region
    $region22: #{tpu_custom_call.1} parent=1 // pred_check
      _
    $region23: #{tpu_custom_call.1} parent=1 // pred_check_branch
      %49 = sbr.rel (0) target = $region25
    $region24: #{tpu_custom_call.1} parent=1 // pred_region
      %50 = dma.done [#allocation8], 128
    $region25: #{tpu_custom_call.1} parent=1 // pred_fallthru
      _
    %51 = sfence
    %s52 = sld [smem:[#allocation2]]
    %s53 = sld [smem:[#allocation2 + $0x1]]
    %s54 = sld [smem:[#allocation2 + $0x2]]
    %s55 = sld [smem:[#allocation2 + $0x3]]
    %s56 = sld [smem:[#allocation2 + $0x4]]
    %v57 = vld [vmem:[#allocation7] sm:$0xff]
    %v58 = vld [vmem:[#allocation6] sm:$0xff]
    %s59 = scalar_lea.vmem [#allocation6], 8
    %v60 = vld [vmem:[%s59] sm:$0xff]
    %s61 = scalar_lea.vmem [#allocation6], 16
    %v62 = vld [vmem:[%s61] sm:$0xff]
    %s63 = scalar_lea.vmem [#allocation6], 24
    %v64 = vld [vmem:[%s63] sm:$0xff]
    %s65 = scalar_lea.vmem [#allocation6], 32
    %v66 = vld [vmem:[%s65] sm:$0xff]
    %v67 = vmax.f32 %v57, -100.0
    %v68 = vmin.f32 %v67, 100.0
    %v69 = vmul.f32 %v62, %v62
    %v70 = vstv %s53
    %v71 = vmul.f32 %v70, %v66
    %v72 = vmul.f32 %v71, %v66
    %v73 = vmul.f32 %v72, %v64
    %v74 = vadd.f32 %v68, %v73
    %v75 = vstv %s54
    %v76 = vmul.f32 %v74, %v75
    %v77 = vstv %s56
    %v78 = vmul.f32 %v77, %v69
    %v79 = vstv %s55
    %v80 = vsub.f32 %v79, %v78
    %v81 = vrcp.pop %v80
    %v82 = vmul.f32 %v80, %v81
    %v83 = vsub.f32 2.0, %v82
    %v84 = vmul.f32 %v81, %v83
    %v85 = vstv %s52
    %v86 = vmul.f32 %v85, %v64
    %v87 = vmul.f32 %v62, %v76
    %v88 = vsub.f32 %v86, %v87
    %v89 = vmul.f32 %v88, %v84
    %v90 = vmul.f32 %v77, %v89
    %v91 = vmul.f32 %v90, %v62
    %v92 = vsub.f32 %v76, %v91
    %v93 = vmul.f32 %v66, 0.05
    %v94 = vand.u32 2147483647, %v93
    %vm95 = vcmp.le.f32.partialorder %v94, 0.7853982
    %vm96 = vcmp.lt.s32.totalorder %v93, 0
    %v97 = vand.u32 %v93, 2139095040
    %v98 = vshrl.u32 %v97, 23
    %v99 = vsub.s32 %v98, 127
    %v100 = vand.u32 2147483647, %v93
    %v101 = vand.u32 %v100, 8388607
    %v102 = vor.u32 %v101, 8388608
    %v103 = vsub.s32 0, %v102
    %v104 = vadd.s32 %v99, 1
    %vm105 = vcmp.gt.s32.totalorder %v104, 0
    %v106 = vsel %vm105, %v104, 0
    %v107 = vshrl.u32 %v106, 5
    %v108 = vand.u32 %v106, 31
    %v109 = vsub.s32 32, %v108
    %v110 = vshrl.u32 683565275, %v109
    %v111 = vshll.u32 683565275, %v108
    %v112 = vshrl.u32 2475754826, %v109
    %v113 = vor.u32 %v111, %v112
    %v114 = vshll.u32 2475754826, %v108
    %v115 = vshrl.u32 2131351028, %v109
    %v116 = vor.u32 %v114, %v115
    %v117 = vshll.u32 2131351028, %v108
    %v118 = vshrl.u32 2102212464, %v109
    %v119 = vor.u32 %v117, %v118
    %v120 = vshll.u32 2102212464, %v108
    %v121 = vshrl.u32 920167782, %v109
    %v122 = vor.u32 %v120, %v121
    %v123 = vshll.u32 920167782, %v108
    %v124 = vshrl.u32 1326507024, %v109
    %v125 = vor.u32 %v123, %v124
    %vm126 = vcmp.lt.s32.totalorder %v107, 1
    %vm127 = vcmp.lt.s32.totalorder %v107, 2
    %vm128 = vcmp.lt.s32.totalorder %v107, 3
    %vm129 = vcmp.lt.s32.totalorder %v107, 4
    %v130 = vsel %vm126, %v110, %v113
    %v131 = vsel %vm129, %v119, 2102212464
    %v132 = vsel %vm128, %v116, %v131
    %v133 = vsel %vm127, %v130, %v132
    %v134 = vsel %vm126, %v113, %v116
    %v135 = vsel %vm129, %v122, 920167782
    %v136 = vsel %vm128, %v119, %v135
    %v137 = vsel %vm127, %v134, %v136
    %v138 = vsel %vm126, %v116, %v119
    %v139 = vsel %vm129, %v125, 1326507024
    %v140 = vsel %vm128, %v122, %v139
    %v141 = vsel %vm127, %v138, %v140
    %v142 = vshll.u32 %v102, 8
    %v143 = vmul.u32.u64.compose %v142, %v141
    %v144 = vextract.low.u32 %v143
    %v145 = vextract.high.u32 %v143
    %v146 = vmul.u32.u64.compose %v142, %v137
    %v147 = vextract.low.u32 %v146
    %v148 = vextract.high.u32 %v146
    %v149 = vmul.u32 %v142, %v133
    %v150 = vadd.s32 %v145, %v147
    %vm151 = vc.u32 %v145, %v147
    %v152 = vadd.s32 %v148, 1
    %v153 = vsel %vm151, %v152, %v148
    %v154 = vadd.s32 %v149, %v153
    %v155 = vadd.s32 %v154, 536870912
    %v156 = vshrl.u32 %v155, 30
    %v157 = vshll.u32 %v156, 30
    %v158 = vsub.s32 %v154, %v157
    %vm159 = vcmp.lt.s32.totalorder %v158, 0
    %v160 = vsub.s32 0, %v158
    %v161 = vsel %vm159, %v160, %v158
    %v162 = vclz %v161
    %v163 = vsub.s32 %v162, 2
    %vm164 = vcmp.gt.s32.totalorder 0, %v163
    %v165 = vsel %vm164, 0, %v163
    %v166 = vsub.s32 32, %v165
    %v167 = vshll.u32 %v158, %v165
    %v168 = vshrl.u32 %v150, %v166
    %v169 = vor.u32 %v167, %v168
    %v170 = vsub.s32 4294967266, %v165
    %v171 = vadd.s32 %v170, 127
    %v172 = vshll.u32 %v171, 23
    %v173 = vor.u32 4788187, %v172
    %v174 = vand.u32 2147483647, %v173
    %v176 = vcvt.s32.f32 %v169
    %v177 = vmul.f32 %v176, %v174
    %v178 = vxor.u32 %v177, 2147483648
    %v179 = vsel %vm96, %v178, %v177
    %v180 = vsub.s32 4, %v156
    %v181 = vsel %vm96, %v180, %v156
    %v182 = vsel %vm95, %v93, %v179
    %v183 = vsel %vm95, 0, %v181
    %v184 = vcosq.f32.pop %v182
    %v185 = vsinq.f32.pop %v182
    %vm186 = vweird.f32 %v93
    %v187 = vand.u32 %v183, 3
    %vm188 = vcmp.lt.s32.totalorder %v187, 2
    %vm189 = vcmp.eq.s32.totalorder %v187, 0
    %v190 = vxor.u32 %v185, 2147483648
    %v191 = vsel %vm189, %v184, %v190
    %vm192 = vcmp.eq.s32.totalorder %v187, 2
    %v193 = vxor.u32 %v184, 2147483648
    %v194 = vsel %vm192, %v193, %v185
    %v195 = vsel %vm188, %v191, %v194
    %v196 = vsel %vm186, nan, %v195
    %v197 = vand.u32 2147483647, %v93
    %vm198 = vcmp.le.f32.partialorder %v197, 0.7853982
    %vm199 = vcmp.lt.s32.totalorder %v93, 0
    %v200 = vand.u32 %v93, 2139095040
    %v201 = vshrl.u32 %v200, 23
    %v202 = vsub.s32 %v201, 127
    %v203 = vand.u32 2147483647, %v93
    %v204 = vand.u32 %v203, 8388607
    %v205 = vor.u32 %v204, 8388608
    %v206 = vsub.s32 0, %v205
    %v207 = vadd.s32 %v202, 1
    %vm208 = vcmp.gt.s32.totalorder %v207, 0
    %v209 = vsel %vm208, %v207, 0
    %v210 = vshrl.u32 %v209, 5
    %v211 = vand.u32 %v209, 31
    %v212 = vsub.s32 32, %v211
    %v213 = vshrl.u32 683565275, %v212
    %v214 = vshll.u32 683565275, %v211
    %v215 = vshrl.u32 2475754826, %v212
    %v216 = vor.u32 %v214, %v215
    %v217 = vshll.u32 2475754826, %v211
    %v218 = vshrl.u32 2131351028, %v212
    %v219 = vor.u32 %v217, %v218
    %v220 = vshll.u32 2131351028, %v211
    %v221 = vshrl.u32 2102212464, %v212
    %v222 = vor.u32 %v220, %v221
    %v223 = vshll.u32 2102212464, %v211
    %v224 = vshrl.u32 920167782, %v212
    %v225 = vor.u32 %v223, %v224
    %v226 = vshll.u32 920167782, %v211
    %v227 = vshrl.u32 1326507024, %v212
    %v228 = vor.u32 %v226, %v227
    %vm229 = vcmp.lt.s32.totalorder %v210, 1
    %vm230 = vcmp.lt.s32.totalorder %v210, 2
    %vm231 = vcmp.lt.s32.totalorder %v210, 3
    %vm232 = vcmp.lt.s32.totalorder %v210, 4
    %v233 = vsel %vm229, %v213, %v216
    %v234 = vsel %vm232, %v222, 2102212464
    %v235 = vsel %vm231, %v219, %v234
    %v236 = vsel %vm230, %v233, %v235
    %v237 = vsel %vm229, %v216, %v219
    %v238 = vsel %vm232, %v225, 920167782
    %v239 = vsel %vm231, %v222, %v238
    %v240 = vsel %vm230, %v237, %v239
    %v241 = vsel %vm229, %v219, %v222
    %v242 = vsel %vm232, %v228, 1326507024
    %v243 = vsel %vm231, %v225, %v242
    %v244 = vsel %vm230, %v241, %v243
    %v245 = vshll.u32 %v205, 8
    %v246 = vmul.u32.u64.compose %v245, %v244
    %v247 = vextract.low.u32 %v246
    %v248 = vextract.high.u32 %v246
    %v249 = vmul.u32.u64.compose %v245, %v240
    %v250 = vextract.low.u32 %v249
    %v251 = vextract.high.u32 %v249
    %v252 = vmul.u32 %v245, %v236
    %v253 = vadd.s32 %v248, %v250
    %vm254 = vc.u32 %v248, %v250
    %v255 = vadd.s32 %v251, 1
    %v256 = vsel %vm254, %v255, %v251
    %v257 = vadd.s32 %v252, %v256
    %v258 = vadd.s32 %v257, 536870912
    %v259 = vshrl.u32 %v258, 30
    %v260 = vshll.u32 %v259, 30
    %v261 = vsub.s32 %v257, %v260
    %vm262 = vcmp.lt.s32.totalorder %v261, 0
    %v263 = vsub.s32 0, %v261
    %v264 = vsel %vm262, %v263, %v261
    %v265 = vclz %v264
    %v266 = vsub.s32 %v265, 2
    %vm267 = vcmp.gt.s32.totalorder 0, %v266
    %v268 = vsel %vm267, 0, %v266
    %v269 = vsub.s32 32, %v268
    %v270 = vshll.u32 %v261, %v268
    %v271 = vshrl.u32 %v253, %v269
    %v272 = vor.u32 %v270, %v271
    %v273 = vsub.s32 4294967266, %v268
    %v274 = vadd.s32 %v273, 127
    %v275 = vshll.u32 %v274, 23
    %v276 = vor.u32 4788187, %v275
    %v277 = vand.u32 2147483647, %v276
    %v279 = vcvt.s32.f32 %v272
    %v280 = vmul.f32 %v279, %v277
    %v281 = vxor.u32 %v280, 2147483648
    %v282 = vsel %vm199, %v281, %v280
    %v283 = vsub.s32 4, %v259
    %v284 = vsel %vm199, %v283, %v259
    %v285 = vsel %vm198, %v93, %v282
    %v286 = vsel %vm198, 0, %v284
    %v287 = vcosq.f32.pop %v285
    %v288 = vsinq.f32.pop %v285
    %vm289 = vweird.f32 %v93
    %v290 = vadd.s32 %v286, 3
    %v291 = vand.u32 %v290, 3
    %vm292 = vcmp.lt.s32.totalorder %v291, 2
    %vm293 = vcmp.eq.s32.totalorder %v291, 0
    %v294 = vxor.u32 %v288, 2147483648
    %v295 = vsel %vm293, %v287, %v294
    %vm296 = vcmp.eq.s32.totalorder %v291, 2
    %v297 = vxor.u32 %v287, 2147483648
    %v298 = vsel %vm296, %v297, %v288
    %v299 = vsel %vm292, %v295, %v298
    %v300 = vsel %vm289, nan, %v299
    %v301 = vmul.f32 %v64, %v64
    %v302 = vadd.f32 %v69, %v301
    %v303 = vmax.f32 %v302, 1e-30
    %v304 = vrsqrt.pop %v303
    %v305 = vmul.f32 %v62, %v196
    %v306 = vmul.f32 %v64, %v300
    %v307 = vsub.f32 %v305, %v306
    %v308 = vmul.f32 %v307, %v304
    %v309 = vmul.f32 %v64, %v196
    %v310 = vmul.f32 %v62, %v300
    %v311 = vadd.f32 %v309, %v310
    %v312 = vmul.f32 %v311, %v304
    %v313 = vmul.f32 %v60, 0.05
    %v314 = vadd.f32 %v58, %v313
    %v315 = vmul.f32 %v92, 0.05
    %v316 = vadd.f32 %v60, %v315
    %v317 = vmul.f32 %v89, 0.05
    %v318 = vadd.f32 %v66, %v317
    %319 = vst [vmem:[#allocation9] sm:$0xff] %v314
    %s320 = scalar_lea.vmem [#allocation9], 8
    %321 = vst [vmem:[%s320] sm:$0xff] %v316
    %s322 = scalar_lea.vmem [#allocation9], 16
    %323 = vst [vmem:[%s322] sm:$0xff] %v308
    %s324 = scalar_lea.vmem [#allocation9], 24
    %325 = vst [vmem:[%s324] sm:$0xff] %v312
    %s326 = scalar_lea.vmem [#allocation9], 32
    %327 = vst [vmem:[%s326] sm:$0xff] %v318
    // Predicated region
    $region26: #{tpu_custom_call.1} parent=1 // pred_check
      _
    $region27: #{tpu_custom_call.1} parent=1 // pred_check_branch
      %329 = sbr.rel (0) target = $region29
    $region28: #{tpu_custom_call.1} parent=1 // pred_region
      %s331 = ssub.s32 640, 640
      %332 = vsyncadd [#allocation4], %s331
      %s333 = sshll.u32 [#allocation9], 4
      %s334 = int_to_ptr.vmem [resolvable:$true] %s333
      %339 = dma.vmem_to_hbm [thread:$0]  %s334, 640, %s3, [#allocation4], 128, 128, 8
    $region29: #{tpu_custom_call.1} parent=1 // pred_fallthru
      _
    // Predicated region
    $region30: #{tpu_custom_call.1} parent=1 // pred_check
      _
    $region31: #{tpu_custom_call.1} parent=1 // pred_check_branch
      %341 = sbr.rel (0) target = $region33
    $region32: #{tpu_custom_call.1} parent=1 // pred_region
      %342 = dma.done [#allocation4], 640
    $region33: #{tpu_custom_call.1} parent=1 // pred_fallthru
      _
    %343 = vsyncpa [#allocation3], 1
    %344 = vsyncpa [#allocation8], 1
    %345 = vsyncpa [#allocation4], 1
    %346 = vsyncpa [#allocation5], 1

</llo_original>
